<compile_context>
chip_gen: v7x
topology: tpu7x:2x2x1
jax: 0.10.0
libtpu: 0.0.40
codegen_flags: <defaults>
</compile_context>

<pallas_src>
import functools

import jax
import jax.numpy as jnp
from jax.experimental import pallas as pl
from jax.experimental.pallas import tpu as pltpu


def _cosface_loss_kernel(labels_ref, x_ref, wt_ref, cw_ref, p_ref, o_ref, *,
                         m, n_total):
    """One grid step: (TB, D) batch tile against the resident (D, C) bf16 W^T."""
    b = pl.program_id(0)

    # The (1,1) output block index is constant over the (arbitrary) batch axis,
    # so the output itself is the running accumulator -- no scratch needed.
    @pl.when(b == 0)
    def _init():
        o_ref[...] = jnp.zeros_like(o_ref)

    p = p_ref[0]                                       # positive_parameter (SMEM scalar)

    # Row L2 normalization of the activations (f32; rsqrt -> single EUP op).
    x = x_ref[...].astype(jnp.float32)                 # (TB, D)
    inv_norm = jax.lax.rsqrt(
        jnp.maximum(jnp.sum(x * x, axis=1, keepdims=True), 1e-24))
    x_n = x * inv_norm

    # Cosine logits on the MXU: bf16 operands, canonical (TB,D)@(D,C) layout,
    # f32 accumulation.  W^T arrives pre-normalized / pre-transposed / bf16.
    wf = jnp.dot(x_n.astype(jnp.bfloat16), wt_ref[...],
                 preferred_element_type=jnp.float32)   # (TB, C) f32

    labels = labels_ref[...]                           # (TB, 1) int32
    col = jax.lax.broadcasted_iota(jnp.int32, wf.shape, 1)
    is_target = col == labels                          # (TB, C)

    logits = p * wf                                    # (TB, C)
    tgt_logit = jnp.sum(jnp.where(is_target, logits, 0.0), axis=1, keepdims=True)
    numerator = tgt_logit - p * m                      # cosface numerator (TB, 1)

    # Stable log-sum-exp with the exclusion sum done as total-minus-target
    # (denominator = exp(numerator) + sum_j exp(p*cos_j) - exp(p*cos_target)).
    z = jnp.maximum(jnp.max(logits, axis=1, keepdims=True), numerator)
    sum_exp = jnp.sum(jnp.exp(logits - z), axis=1, keepdims=True)
    denom = jnp.exp(numerator - z) + (sum_exp - jnp.exp(tgt_logit - z))
    L = numerator - (z + jnp.log(denom))               # (TB, 1)

    # Weighted running sum over the batch; padded rows carry class_weight == 0.
    o_ref[...] += jnp.sum(L * cw_ref[...], axis=(0, 1), keepdims=True)

    @pl.when(b == pl.num_programs(0) - 1)
    def _finalize():
        o_ref[...] = -(o_ref[...] * (1.0 / n_total))


def angular_penalty_sm_loss(x, fc_weight, labels, class_weight, positive_parameter,
                            *, m=0.2, tb=256, vmem_limit_bytes=None):
    """Fused Pallas forward of AngularPenaltySMLoss (cosface branch).

    Returns (loss_scalar, positive_parameter), matching the PyTorch forward.
    `tb` is the batch tile (>=128 recommended; 256 for v6e/v7x, 128 for v5e).
    For large tb * out_features, raise `vmem_limit_bytes` above the 32 MiB
    scoped default.
    """
    n, d = x.shape
    c, d2 = fc_weight.shape
    assert d == d2

    # --- W preprocessing, done ONCE (not per batch tile): L2-normalize rows,
    # transpose to (D, C) for the canonical MXU layout, cast to bf16.
    w32 = fc_weight.astype(jnp.float32)
    w_inv = jax.lax.rsqrt(jnp.maximum(jnp.sum(w32 * w32, axis=1, keepdims=True), 1e-24))
    wt = (w32 * w_inv).T.astype(jnp.bfloat16)          # (D, C)

    # --- Pad the batch to a multiple of the tile; padded rows get label 0,
    # class_weight 0 (so they contribute nothing) and zero features.
    n_pad = pl.cdiv(n, tb) * tb
    pad = n_pad - n
    labels2d = labels.astype(jnp.int32).reshape(n, 1)
    cw2d = class_weight.astype(jnp.float32).reshape(n, 1)
    xf = x
    if pad:
        xf = jnp.pad(xf, ((0, pad), (0, 0)))
        labels2d = jnp.pad(labels2d, ((0, pad), (0, 0)))
        cw2d = jnp.pad(cw2d, ((0, pad), (0, 0)))

    p1 = jnp.asarray(positive_parameter, dtype=jnp.float32).reshape(1)

    kernel = functools.partial(_cosface_loss_kernel, m=float(m), n_total=float(n))

    cp_kwargs = dict(dimension_semantics=("arbitrary",))  # output carries across batch
    if vmem_limit_bytes is not None:
        cp_kwargs["vmem_limit_bytes"] = int(vmem_limit_bytes)

    out = pl.pallas_call(
        kernel,
        out_shape=jax.ShapeDtypeStruct((1, 1), jnp.float32),
        grid_spec=pltpu.PrefetchScalarGridSpec(
            num_scalar_prefetch=0,
            grid=(n_pad // tb,),
            in_specs=[
                pl.BlockSpec((tb, 1), lambda b: (b, 0)),            # labels
                pl.BlockSpec((tb, d), lambda b: (b, 0)),            # x
                pl.BlockSpec((d, c), lambda b: (0, 0)),             # W_n^T (resident, bf16)
                pl.BlockSpec((tb, 1), lambda b: (b, 0)),            # class_weight
                pl.BlockSpec(memory_space=pltpu.MemorySpace.SMEM),  # positive_parameter
            ],
            out_specs=pl.BlockSpec((1, 1), lambda b: (0, 0)),
        ),
        compiler_params=pltpu.CompilerParams(**cp_kwargs),
    )(labels2d, xf, wt, cw2d, p1)

    loss = out.reshape(())
    return loss, jnp.asarray(positive_parameter, dtype=jnp.float32).reshape(())


if __name__ == "__main__":
    key = jax.random.PRNGKey(0)
    k_x, k_w, k_lab, k_cw = jax.random.split(key, 4)

    N, D, C = 300, 64, 128    # batch, in_features, out_features (small)
    M_MARGIN = 0.2            # cosface default margin
    TB = 128                  # batch tile -> N pads to 384, grid of 3 (exercises
                              # both the padding path and the accumulator)

    x = jax.random.normal(k_x, (N, D), dtype=jnp.float32)
    fc_weight = jax.random.normal(k_w, (C, D), dtype=jnp.float32)   # fc.weight: (out, in)
    labels = jax.random.randint(k_lab, (N,), 0, C, dtype=jnp.int32)
    class_weight = jax.random.uniform(k_cw, (N,), dtype=jnp.float32,
                                      minval=0.5, maxval=1.5)
    positive_parameter = jnp.asarray(1.5, dtype=jnp.float32)

    # Mirror the module's input asserts.
    assert int(labels.min()) >= 0 and int(labels.max()) < C

    loss, p_out = angular_penalty_sm_loss(x, fc_weight, labels, class_weight,
                                          positive_parameter, m=M_MARGIN, tb=TB)
    loss = jax.block_until_ready(loss)

    # Pure-JAX full-precision reference of the PyTorch forward (cosface branch).
    x_n = x / jnp.maximum(jnp.linalg.norm(x, axis=1, keepdims=True), 1e-12)
    w_n = fc_weight / jnp.maximum(jnp.linalg.norm(fc_weight, axis=1, keepdims=True), 1e-12)
    wf = jnp.dot(x_n, w_n.T, precision=jax.lax.Precision.HIGHEST)
    tgt = wf[jnp.arange(N), labels]
    num = positive_parameter * (tgt - M_MARGIN)
    onehot = jax.nn.one_hot(labels, C, dtype=jnp.bool_)
    excl = jnp.sum(jnp.where(onehot, 0.0, jnp.exp(positive_parameter * wf)), axis=1)
    denom = jnp.exp(num) + excl
    L_ref = num - jnp.log(denom)
    expected = -jnp.mean(L_ref * class_weight)

    assert loss.shape == () and loss.dtype == jnp.float32
    # Tolerance accounts for the bf16 MXU operands (f32 accumulation).
    assert jnp.allclose(loss, expected, rtol=2e-2, atol=2e-2), (loss, expected)
    assert jnp.allclose(p_out, positive_parameter)

    print("KERNEL_OK")
</pallas_src>

<mosaic_0001>
module attributes {stable_mosaic.version = 11 : i64} {
  func.func @_cosface_loss_kernel(%arg0: i32, %arg1: memref<128x1xi32, #tpu.memory_space<vmem>>, %arg2: memref<128x64xf32, #tpu.memory_space<vmem>>, %arg3: memref<64x128xbf16, #tpu.memory_space<vmem>>, %arg4: memref<128x1xf32, #tpu.memory_space<vmem>>, %arg5: memref<1xf32, #tpu.memory_space<smem>>, %arg6: memref<1x1xf32, #tpu.memory_space<vmem>>) attributes {dimension_semantics = [#tpu.dimension_semantics<arbitrary>], iteration_bounds = array<i64: 3>, scalar_prefetch = 0 : i64, scratch_operands = 0 : i64, tpu.core_type = #tpu.core_type<tc>, window_params = [{transform_indices = @transform_0, window_bounds = array<i64: 128, 1>}, {transform_indices = @transform_1, window_bounds = array<i64: 128, 64>}, {pipeline_mode = #tpu.pipeline_mode<synchronous>, transform_indices = @transform_2, window_bounds = array<i64: 64, 128>}, {transform_indices = @transform_3, window_bounds = array<i64: 128, 1>}, {transform_indices = @transform_4, window_bounds = array<i64: 1>}, {pipeline_mode = #tpu.pipeline_mode<synchronous>, transform_indices = @transform_5, window_bounds = array<i64: 1, 1>}]} {
    %c0_i32 = arith.constant 0 : i32
    %0 = arith.cmpi eq, %arg0, %c0_i32 : i32
    %1 = arith.extui %0 : i1 to i32
    %c0_i32_0 = arith.constant 0 : i32
    %2 = arith.cmpi ne, %1, %c0_i32_0 : i32
    scf.if %2 {
      %cst_22 = arith.constant 0.000000e+00 : f32
      %59 = vector.broadcast %cst_22 : f32 to vector<1x1xf32>
      %c0_23 = arith.constant 0 : index
      %c0_24 = arith.constant 0 : index
      %60 = vector.load %arg6[%c0_23, %c0_24] : memref<1x1xf32, #tpu.memory_space<vmem>>, vector<1x1xf32>
      tpu.vector_store %arg6[%c0_23, %c0_24], %59 {strides = array<i32>} : memref<1x1xf32, #tpu.memory_space<vmem>>, vector<1x1xf32>,
    } else {
    }
    %c0 = arith.constant 0 : index
    %3 = memref.load %arg5[%c0] : memref<1xf32, #tpu.memory_space<smem>>
    %c0_1 = arith.constant 0 : index
    %c0_2 = arith.constant 0 : index
    %4 = vector.load %arg2[%c0_1, %c0_2] : memref<128x64xf32, #tpu.memory_space<vmem>>, vector<128x64xf32>
    %5 = arith.mulf %4, %4 : vector<128x64xf32>
    %cst = arith.constant dense<0.000000e+00> : vector<128xf32>
    %6 = vector.multi_reduction <add>, %5, %cst [1] : vector<128x64xf32> to vector<128xf32>
    %7 = vector.shape_cast %6 : vector<128xf32> to vector<128x1xf32>
    %cst_3 = arith.constant 1.000000e-24 : f32
    %8 = vector.broadcast %cst_3 : f32 to vector<128x1xf32>
    %9 = arith.maximumf %7, %8 : vector<128x1xf32>
    %10 = math.rsqrt %9 : vector<128x1xf32>
    %11 = vector.broadcast %10 : vector<128x1xf32> to vector<128x64xf32>
    %12 = arith.mulf %4, %11 : vector<128x64xf32>
    %13 = arith.truncf %12 : vector<128x64xf32> to vector<128x64xbf16>
    %c0_4 = arith.constant 0 : index
    %c0_5 = arith.constant 0 : index
    %14 = vector.load %arg3[%c0_4, %c0_5] : memref<64x128xbf16, #tpu.memory_space<vmem>>, vector<64x128xbf16>
    %cst_6 = arith.constant dense<0.000000e+00> : vector<128x128xf32>
    %15 = tpu.matmul %13, %14, %cst_6 {dimension_numbers = #tpu.dot_dimension_numbers<[1], [0], [0], [1], [0, 0, 1, 1], [], []>} : vector<128x64xbf16>, vector<64x128xbf16>, vector<128x128xf32> -> vector<128x128xf32>
    %c0_7 = arith.constant 0 : index
    %c0_8 = arith.constant 0 : index
    %16 = vector.load %arg1[%c0_7, %c0_8] : memref<128x1xi32, #tpu.memory_space<vmem>>, vector<128x1xi32>
    %17 = tpu.iota {dimensions = array<i32: 1>} : vector<128x128xi32>
    %18 = vector.broadcast %16 : vector<128x1xi32> to vector<128x128xi32>
    %19 = arith.cmpi eq, %17, %18 : vector<128x128xi32>
    %20 = vector.broadcast %3 : f32 to vector<128x128xf32>
    %21 = arith.mulf %20, %15 : vector<128x128xf32>
    %cst_9 = arith.constant 0.000000e+00 : f32
    %22 = vector.broadcast %cst_9 : f32 to vector<128x128xf32>
    %23 = arith.select %19, %21, %22 : vector<128x128xi1>, vector<128x128xf32>
    %cst_10 = arith.constant dense<0.000000e+00> : vector<128xf32>
    %24 = vector.multi_reduction <add>, %23, %cst_10 [1] : vector<128x128xf32> to vector<128xf32>
    %25 = vector.shape_cast %24 : vector<128xf32> to vector<128x1xf32>
    %cst_11 = arith.constant 2.000000e-01 : f32
    %26 = arith.mulf %3, %cst_11 : f32
    %27 = vector.broadcast %26 : f32 to vector<128x1xf32>
    %28 = arith.subf %25, %27 : vector<128x1xf32>
    %cst_12 = arith.constant dense<0xFF800000> : vector<128xf32>
    %29 = vector.multi_reduction <maximumf>, %21, %cst_12 [1] : vector<128x128xf32> to vector<128xf32>
    %30 = vector.shape_cast %29 : vector<128xf32> to vector<128x1xf32>
    %31 = arith.maximumf %30, %28 : vector<128x1xf32>
    %32 = vector.broadcast %31 : vector<128x1xf32> to vector<128x128xf32>
    %33 = arith.subf %21, %32 : vector<128x128xf32>
    %34 = math.exp %33 : vector<128x128xf32>
    %cst_13 = arith.constant dense<0.000000e+00> : vector<128xf32>
    %35 = vector.multi_reduction <add>, %34, %cst_13 [1] : vector<128x128xf32> to vector<128xf32>
    %36 = vector.shape_cast %35 : vector<128xf32> to vector<128x1xf32>
    %37 = arith.subf %28, %31 : vector<128x1xf32>
    %38 = math.exp %37 : vector<128x1xf32>
    %39 = arith.subf %25, %31 : vector<128x1xf32>
    %40 = math.exp %39 : vector<128x1xf32>
    %41 = arith.subf %36, %40 : vector<128x1xf32>
    %42 = arith.addf %38, %41 : vector<128x1xf32>
    %43 = math.log %42 : vector<128x1xf32>
    %44 = arith.addf %31, %43 : vector<128x1xf32>
    %45 = arith.subf %28, %44 : vector<128x1xf32>
    %c0_14 = arith.constant 0 : index
    %c0_15 = arith.constant 0 : index
    %46 = vector.load %arg6[%c0_14, %c0_15] : memref<1x1xf32, #tpu.memory_space<vmem>>, vector<1x1xf32>
    %c0_16 = arith.constant 0 : index
    %c0_17 = arith.constant 0 : index
    %47 = vector.load %arg4[%c0_16, %c0_17] : memref<128x1xf32, #tpu.memory_space<vmem>>, vector<128x1xf32>
    %48 = arith.mulf %45, %47 : vector<128x1xf32>
    %49 = vector.shape_cast %48 : vector<128x1xf32> to vector<1x128x1xf32>
    %cst_18 = arith.constant dense<0.000000e+00> : vector<1xf32>
    %50 = vector.multi_reduction <add>, %49, %cst_18 [1, 2] : vector<1x128x1xf32> to vector<1xf32>
    %51 = vector.shape_cast %50 : vector<1xf32> to vector<1x1x1xf32>
    %52 = vector.extract %51[0, 0, 0] : f32 from vector<1x1x1xf32>
    %53 = vector.broadcast %52 : f32 to vector<1x1xf32>
    %54 = arith.addf %46, %53 : vector<1x1xf32>
    %c0_19 = arith.constant 0 : index
    %c0_20 = arith.constant 0 : index
    %55 = vector.load %arg6[%c0_19, %c0_20] : memref<1x1xf32, #tpu.memory_space<vmem>>, vector<1x1xf32>
    tpu.vector_store %arg6[%c0_19, %c0_20], %54 {strides = array<i32>} : memref<1x1xf32, #tpu.memory_space<vmem>>, vector<1x1xf32>,
    %c2_i32 = arith.constant 2 : i32
    %56 = arith.cmpi eq, %arg0, %c2_i32 : i32
    %57 = arith.extui %56 : i1 to i32
    %c0_i32_21 = arith.constant 0 : i32
    %58 = arith.cmpi ne, %57, %c0_i32_21 : i32
    scf.if %58 {
      %c0_22 = arith.constant 0 : index
      %c0_23 = arith.constant 0 : index
      %59 = vector.load %arg6[%c0_22, %c0_23] : memref<1x1xf32, #tpu.memory_space<vmem>>, vector<1x1xf32>
      %cst_24 = arith.constant 0.00333333341 : f32
      %60 = vector.broadcast %cst_24 : f32 to vector<1x1xf32>
      %61 = arith.mulf %59, %60 : vector<1x1xf32>
      %cst_25 = arith.constant 0.000000e+00 : f32
      %62 = vector.broadcast %cst_25 : f32 to vector<1x1xf32>
      %63 = arith.subf %62, %61 : vector<1x1xf32>
      %c0_26 = arith.constant 0 : index
      %c0_27 = arith.constant 0 : index
      %64 = vector.load %arg6[%c0_26, %c0_27] : memref<1x1xf32, #tpu.memory_space<vmem>>, vector<1x1xf32>
      tpu.vector_store %arg6[%c0_26, %c0_27], %63 {strides = array<i32>} : memref<1x1xf32, #tpu.memory_space<vmem>>, vector<1x1xf32>,
    } else {
    }
    return
  }
  func.func @transform_0(%arg0: i32) -> (i32, i32) {
    %c0_i32 = arith.constant 0 : i32
    %c0_i32_0 = arith.constant 0 : i32
    return %arg0, %c0_i32 : i32, i32
  }
  func.func @transform_1(%arg0: i32) -> (i32, i32) {
    %c0_i32 = arith.constant 0 : i32
    %c0_i32_0 = arith.constant 0 : i32
    return %arg0, %c0_i32 : i32, i32
  }
  func.func @transform_2(%arg0: i32) -> (i32, i32) {
    %c0_i32 = arith.constant 0 : i32
    %c0_i32_0 = arith.constant 0 : i32
    %c0_i32_1 = arith.constant 0 : i32
    return %c0_i32, %c0_i32_0 : i32, i32
  }
  func.func @transform_3(%arg0: i32) -> (i32, i32) {
    %c0_i32 = arith.constant 0 : i32
    %c0_i32_0 = arith.constant 0 : i32
    return %arg0, %c0_i32 : i32, i32
  }
  func.func @transform_4(%arg0: i32) -> i32 {
    %c0_i32 = arith.constant 0 : i32
    %c0_i32_0 = arith.constant 0 : i32
    return %c0_i32 : i32
  }
  func.func @transform_5(%arg0: i32) -> (i32, i32) {
    %c0_i32 = arith.constant 0 : i32
    %c0_i32_0 = arith.constant 0 : i32
    %c0_i32_1 = arith.constant 0 : i32
    return %c0_i32, %c0_i32_0 : i32, i32
  }
}

</mosaic_0001>

<llo_original>
// kernel: tpu_custom_call.1
$region0: #{tpu_custom_call.1}
  #allocation0 [shape = 'u32[]', space=smem, size = 0x4, offset = 0x4, fixed_abs, tag = 'smem constant byte address 0x4 - core index']
  #allocation1 [shape = 'u32[144,128]{1,0:T(1,128)}', space=vmem, size = 0x12000, scoped, tag = 'internal scratch']
  #allocation2 [shape = 'f32[1]{0:T(128)S(6)}', space=smem, size = 0x200, scoped, tag = 'scoped memory for tpu_custom_call.1']
  %s0 = inlined_call_operand.vmem [shape: s32[384,1], index: 0, kind: input, shape index: {}]
  %s1 = inlined_call_operand.vmem [shape: f32[384,64], index: 1, kind: input, shape index: {}]
  %s2 = inlined_call_operand.vmem [shape: bf16[64,128], index: 2, kind: input, shape index: {}]
  %s3 = inlined_call_operand.vmem [shape: f32[384,1], index: 3, kind: input, shape index: {}]
  %s4 = inlined_call_operand.<no memory space> [shape: f32[1], index: 4, kind: input, shape index: {}]
  %s5 = inlined_call_operand.hbm [shape: f32[1,1], index: 5, kind: output, shape index: {}]
  %s6 = sld [smem:[#allocation0]]
  $region61: #{tpu_custom_call.1} parent=0
    _
  %s8 = ssub.s32 1, %s6
  %s9 = scalar_select 0, %s8, %s6
  %10 = sst [smem:[#allocation2]] %s4
  $region1: #{tpu_custom_call.1} parent=0
    #allocation3 [shape = 'u8[512]{0}', space=vmem, size = 0x400, scoped, tag = 'output window, operand 0, single buffered']
    #allocation4 [shape = 's32[2]{0}', space=sflag, size = 0x8, scoped, tag = 'scoped memory for tpu_custom_call.1']
    %11 = vsyncpa [#allocation4], 0
    loop: start=0, step=1, limit=5
    $region2: #{tpu_custom_call.1} parent=1 // loop_pre_header
      _
    $region3: #{tpu_custom_call.1} parent=1 // loop_header
      %s13 = sphi 0, %s17
      %p14 = scmp.ge.s32.totalorder %s13, 5
      %s23 = sphi 0, %s25
      %s26 = sphi 0, %s23
      %s27 = sphi 0, %s26
      %s43 = sphi 0, %s27
      %s49 = sphi 0, %s51
      %s52 = sphi 0, %s49
      %s53 = sphi 0, %s52
      %s69 = sphi 0, %s53
      %s73 = sphi 0, %s73
      %s75 = sphi 0, %s73
      %s76 = sphi 0, %s75
      %s90 = sphi 0, %s76
      %s96 = sphi 0, %s98
      %s99 = sphi 0, %s96
      %s100 = sphi 0, %s99
      %s116 = sphi 0, %s100
      %s120 = sphi 0, %s120
      %s122 = sphi 0, %s120
      %s123 = sphi 0, %s122
      %s137 = sphi 0, %s123
      %s141 = sphi 0, %s141
      %s143 = sphi 0, %s141
      %s144 = sphi 0, %s143
      %s158 = sphi 0, %s144
    $region4: #{tpu_custom_call.1} parent=1 // loop_header_branch
      %16 = sbr.rel (%p14) target = $region8
    $region5: #{tpu_custom_call.1} parent=1 // loop_body
      %s18 = ssub.s32 %s13, 1
      %s19 = ssub.s32 %s13, 2
      %s20 = sadd.s32 %s13, 1
      %s21 = ssub.s32 %s13, %s20
      %p22 = scmp.eq.s32.totalorder %s21, 0
      %s24 = sadd.s32 %s23, 1
      %s25 = scalar_select %p22, %s23, %s24
      %p28 = pneg %p22
      %p29 = scmp.eq.s32.totalorder %s13, 2
      %p30 = por %p28, %p29
      %p31 = scmp.ne.s32.totalorder %s23, %s26
      %p32 = scmp.eq.s32.totalorder %s13, 0
      %p33 = por %p31, %p32
      %p34 = scmp.ne.s32.totalorder %s23, %s26
      %p35 = scmp.eq.s32.totalorder %s18, 2
      %p36 = por %p34, %p35
      %p37 = scmp.ne.s32.totalorder %s26, %s27
      %p38 = scmp.eq.s32.totalorder %s18, 0
      %p39 = por %p37, %p38
      %p40 = scmp.ne.s32.totalorder %s26, %s27
      %p41 = scmp.eq.s32.totalorder %s19, 2
      %p42 = por %p40, %p41
      %p44 = scmp.ne.s32.totalorder %s27, %s43
      %p45 = scmp.eq.s32.totalorder %s19, 0
      %p46 = por %p44, %p45
      %s47 = ssub.s32 %s13, %s20
      %p48 = scmp.eq.s32.totalorder %s47, 0
      %s50 = sadd.s32 %s49, 1
      %s51 = scalar_select %p48, %s49, %s50
      %p54 = pneg %p48
      %p55 = scmp.eq.s32.totalorder %s13, 2
      %p56 = por %p54, %p55
      %p57 = scmp.ne.s32.totalorder %s49, %s52
      %p58 = scmp.eq.s32.totalorder %s13, 0
      %p59 = por %p57, %p58
      %p60 = scmp.ne.s32.totalorder %s49, %s52
      %p61 = scmp.eq.s32.totalorder %s18, 2
      %p62 = por %p60, %p61
      %p63 = scmp.ne.s32.totalorder %s52, %s53
      %p64 = scmp.eq.s32.totalorder %s18, 0
      %p65 = por %p63, %p64
      %p66 = scmp.ne.s32.totalorder %s52, %s53
      %p67 = scmp.eq.s32.totalorder %s19, 2
      %p68 = por %p66, %p67
      %p70 = scmp.ne.s32.totalorder %s53, %s69
      %p71 = scmp.eq.s32.totalorder %s19, 0
      %p72 = por %p70, %p71
      %s74 = sadd.s32 %s73, 1
      %p77 = scmp.eq.s32.totalorder %s13, 2
      %p78 = scmp.ne.s32.totalorder %s73, %s75
      %p79 = scmp.eq.s32.totalorder %s13, 0
      %p80 = por %p78, %p79
      %p81 = scmp.ne.s32.totalorder %s73, %s75
      %p82 = scmp.eq.s32.totalorder %s18, 2
      %p83 = por %p81, %p82
      %p84 = scmp.ne.s32.totalorder %s75, %s76
      %p85 = scmp.eq.s32.totalorder %s18, 0
      %p86 = por %p84, %p85
      %p87 = scmp.ne.s32.totalorder %s75, %s76
      %p88 = scmp.eq.s32.totalorder %s19, 2
      %p89 = por %p87, %p88
      %p91 = scmp.ne.s32.totalorder %s76, %s90
      %p92 = scmp.eq.s32.totalorder %s19, 0
      %p93 = por %p91, %p92
      %s94 = ssub.s32 %s13, %s20
      %p95 = scmp.eq.s32.totalorder %s94, 0
      %s97 = sadd.s32 %s96, 1
      %s98 = scalar_select %p95, %s96, %s97
      %p101 = pneg %p95
      %p102 = scmp.eq.s32.totalorder %s13, 2
      %p103 = por %p101, %p102
      %p104 = scmp.ne.s32.totalorder %s96, %s99
      %p105 = scmp.eq.s32.totalorder %s13, 0
      %p106 = por %p104, %p105
      %p107 = scmp.ne.s32.totalorder %s96, %s99
      %p108 = scmp.eq.s32.totalorder %s18, 2
      %p109 = por %p107, %p108
      %p110 = scmp.ne.s32.totalorder %s99, %s100
      %p111 = scmp.eq.s32.totalorder %s18, 0
      %p112 = por %p110, %p111
      %p113 = scmp.ne.s32.totalorder %s99, %s100
      %p114 = scmp.eq.s32.totalorder %s19, 2
      %p115 = por %p113, %p114
      %p117 = scmp.ne.s32.totalorder %s100, %s116
      %p118 = scmp.eq.s32.totalorder %s19, 0
      %p119 = por %p117, %p118
      %s121 = sadd.s32 %s120, 1
      %p124 = scmp.eq.s32.totalorder %s13, 2
      %p125 = scmp.ne.s32.totalorder %s120, %s122
      %p126 = scmp.eq.s32.totalorder %s13, 0
      %p127 = por %p125, %p126
      %p128 = scmp.ne.s32.totalorder %s120, %s122
      %p129 = scmp.eq.s32.totalorder %s18, 2
      %p130 = por %p128, %p129
      %p131 = scmp.ne.s32.totalorder %s122, %s123
      %p132 = scmp.eq.s32.totalorder %s18, 0
      %p133 = por %p131, %p132
      %p134 = scmp.ne.s32.totalorder %s122, %s123
      %p135 = scmp.eq.s32.totalorder %s19, 2
      %p136 = por %p134, %p135
      %p138 = scmp.ne.s32.totalorder %s123, %s137
      %p139 = scmp.eq.s32.totalorder %s19, 0
      %p140 = por %p138, %p139
      %s142 = sadd.s32 %s141, 1
      %p145 = scmp.eq.s32.totalorder %s13, 2
      %p146 = scmp.ne.s32.totalorder %s141, %s143
      %p147 = scmp.eq.s32.totalorder %s13, 0
      %p148 = por %p146, %p147
      %p149 = scmp.ne.s32.totalorder %s141, %s143
      %p150 = scmp.eq.s32.totalorder %s18, 2
      %p151 = por %p149, %p150
      %p152 = scmp.ne.s32.totalorder %s143, %s144
      %p153 = scmp.eq.s32.totalorder %s18, 0
      %p154 = por %p152, %p153
      %p155 = scmp.ne.s32.totalorder %s143, %s144
      %p156 = scmp.eq.s32.totalorder %s19, 2
      %p157 = por %p155, %p156
      %p159 = scmp.ne.s32.totalorder %s144, %s158
      %p160 = scmp.eq.s32.totalorder %s19, 0
      %p161 = por %p159, %p160
      %p162 = scmp.le.s32.totalorder 1, %s13
      %p163 = scmp.lt.s32.totalorder %s13, 4
      %p164 = pnand %p162, %p163
      %p165 = pneg %p164
      // Predicated region
      $region9: #{tpu_custom_call.1} parent=5 // pred_check
        _
      $region10: #{tpu_custom_call.1} parent=5 // pred_check_branch
        %167 = sbr.rel (%p164) target = $region12
      $region11: #{tpu_custom_call.1} parent=5 // pred_region
        %s168 = ssub.s32 %s13, 1
        // Predicated region
        $region13: #{tpu_custom_call.1} parent=11 // pred_check
          %p169 = pneg %p86
        $region14: #{tpu_custom_call.1} parent=11 // pred_check_branch
          %171 = sbr.rel (%p169) target = $region16
        $region15: #{tpu_custom_call.1} parent=11 // pred_region
          _
        $region16: #{tpu_custom_call.1} parent=11 // pred_fallthru
          _
        // Predicated region
        $region17: #{tpu_custom_call.1} parent=11 // pred_check
          %p172 = pneg %p133
        $region18: #{tpu_custom_call.1} parent=11 // pred_check_branch
          %174 = sbr.rel (%p172) target = $region20
        $region19: #{tpu_custom_call.1} parent=11 // pred_region
          _
        $region20: #{tpu_custom_call.1} parent=11 // pred_fallthru
          _
      $region12: #{tpu_custom_call.1} parent=5 // pred_fallthru
        _
      %p175 = scmp.lt.s32.totalorder %s13, 3
      // Predicated region
      $region21: #{tpu_custom_call.1} parent=5 // pred_check
        %p176 = pneg %p175
      $region22: #{tpu_custom_call.1} parent=5 // pred_check_branch
        %178 = sbr.rel (%p176) target = $region24
      $region23: #{tpu_custom_call.1} parent=5 // pred_region
        // Predicated region
        $region25: #{tpu_custom_call.1} parent=23 // pred_check
          %p179 = pneg %p33
        $region26: #{tpu_custom_call.1} parent=23 // pred_check_branch
          %181 = sbr.rel (%p179) target = $region28
        $region27: #{tpu_custom_call.1} parent=23 // pred_region
          %s182 = smul.u32 16, %s13
          %p183 = scmp.lt.s32.totalorder %s182, 47
          %s184 = scalar_select %p183, %s182, 47
          %s185 = smul.addr %s184, 8
          %s186 = scalar_lea.vmem %s0, %s185
          %s187 = smul.u32 16, %s13
        $region28: #{tpu_custom_call.1} parent=23 // pred_fallthru
          _
        // Predicated region
        $region29: #{tpu_custom_call.1} parent=23 // pred_check
          %p188 = pneg %p59
        $region30: #{tpu_custom_call.1} parent=23 // pred_check_branch
          %190 = sbr.rel (%p188) target = $region32
        $region31: #{tpu_custom_call.1} parent=23 // pred_region
          %s191 = smul.u32 16, %s13
          %p192 = scmp.lt.s32.totalorder %s191, 47
          %s193 = scalar_select %p192, %s191, 47
          %s194 = smul.addr %s193, 8
          %s195 = scalar_lea.vmem %s1, %s194
          %s196 = smul.u32 16, %s13
        $region32: #{tpu_custom_call.1} parent=23 // pred_fallthru
          _
        // Predicated region
        $region33: #{tpu_custom_call.1} parent=23 // pred_check
          %p197 = pneg %p106
        $region34: #{tpu_custom_call.1} parent=23 // pred_check_branch
          %199 = sbr.rel (%p197) target = $region36
        $region35: #{tpu_custom_call.1} parent=23 // pred_region
          %s200 = smul.u32 16, %s13
          %p201 = scmp.lt.s32.totalorder %s200, 47
          %s202 = scalar_select %p201, %s200, 47
          %s203 = smul.addr %s202, 8
          %s204 = scalar_lea.vmem %s3, %s203
          %s205 = smul.u32 16, %s13
        $region36: #{tpu_custom_call.1} parent=23 // pred_fallthru
          _
      $region24: #{tpu_custom_call.1} parent=5 // pred_fallthru
        _
      %p206 = scmp.le.s32.totalorder 1, %s13
      %p207 = scmp.lt.s32.totalorder %s13, 4
      %p208 = pnand %p206, %p207
      %p209 = pneg %p208
      // Predicated region
      $region37: #{tpu_custom_call.1} parent=5 // pred_check
        _
      $region38: #{tpu_custom_call.1} parent=5 // pred_check_branch
        %211 = sbr.rel (%p208) target = $region40
      $region39: #{tpu_custom_call.1} parent=5 // pred_region
        %s212 = ssub.s32 %s13, 1
        %s213 = smul.u32 16, %s18
        %p214 = scmp.lt.s32.totalorder %s213, 47
        %s215 = scalar_select %p214, %s213, 47
        %s216 = smul.addr %s215, 8
        %s217 = scalar_lea.vmem %s0, %s216
        %p218 = pneg %p39
        %p219 = pneg %p36
        %s220 = smul.u32 16, %s18
        %p221 = scmp.lt.s32.totalorder %s220, 47
        %s222 = scalar_select %p221, %s220, 47
        %s223 = smul.addr %s222, 8
        %s224 = scalar_lea.vmem %s1, %s223
        %p225 = pneg %p65
        %p226 = pneg %p62
        %p227 = pneg %p86
        %p228 = pneg %p83
        %s229 = smul.u32 16, %s18
        %p230 = scmp.lt.s32.totalorder %s229, 47
        %s231 = scalar_select %p230, %s229, 47
        %s232 = smul.addr %s231, 8
        %s233 = scalar_lea.vmem %s3, %s232
        %p234 = pneg %p112
        %p235 = pneg %p109
        %p236 = pneg %p133
        %p237 = pneg %p130
        %p238 = pneg %p154
        %p239 = pneg %p151
        %s240 = smul.u32 16, %s18
        %p241 = scmp.lt.s32.totalorder %s240, 47
        %s242 = scalar_select %p241, %s240, 47
        %s243 = smul.addr %s242, 8
        %s244 = scalar_lea.vmem %s0, %s243
        %s245 = smul.u32 16, %s18
        %s246 = smul.u32 16, %s18
        %p247 = scmp.lt.s32.totalorder %s246, 47
        %s248 = scalar_select %p247, %s246, 47
        %s249 = smul.addr %s248, 8
        %s250 = scalar_lea.vmem %s1, %s249
        %s251 = smul.u32 16, %s18
        %s252 = smul.u32 16, %s18
        %p253 = scmp.lt.s32.totalorder %s252, 47
        %s254 = scalar_select %p253, %s252, 47
        %s255 = smul.addr %s254, 8
        %s256 = scalar_lea.vmem %s3, %s255
        %s257 = smul.u32 16, %s18
        %p259 = scmp.eq.s32.totalorder %s18, 0
        // Predicated region
        $region41: #{tpu_custom_call.1} parent=39 // pred_check
          %p260 = pneg %p259
        $region42: #{tpu_custom_call.1} parent=39 // pred_check_branch
          %262 = sbr.rel (%p260) target = $region44
        $region43: #{tpu_custom_call.1} parent=39 // pred_region
          %vm263 = vcmask 0
          %264 = vst.msk [vmem:[#allocation3] sm:$0x1] %vm263, 0.0
        $region44: #{tpu_custom_call.1} parent=39 // pred_fallthru
          _
        %s265 = sld [smem:[#allocation2]]
        %v266 = vld [vmem:[%s250] sm:$0xff]
        %v267 = vld [vmem:[%s250 + $0x8] sm:$0xff]
        %v268 = vld [vmem:[%s250 + $0x10] sm:$0xff]
        %v269 = vld [vmem:[%s250 + $0x18] sm:$0xff]
        %v270 = vld [vmem:[%s250 + $0x20] sm:$0xff]
        %v271 = vld [vmem:[%s250 + $0x28] sm:$0xff]
        %v272 = vld [vmem:[%s250 + $0x30] sm:$0xff]
        %v273 = vld [vmem:[%s250 + $0x38] sm:$0xff]
        %v274 = vld [vmem:[%s250 + $0x40] sm:$0xff]
        %v275 = vld [vmem:[%s250 + $0x48] sm:$0xff]
        %v276 = vld [vmem:[%s250 + $0x50] sm:$0xff]
        %v277 = vld [vmem:[%s250 + $0x58] sm:$0xff]
        %v278 = vld [vmem:[%s250 + $0x60] sm:$0xff]
        %v279 = vld [vmem:[%s250 + $0x68] sm:$0xff]
        %v280 = vld [vmem:[%s250 + $0x70] sm:$0xff]
        %v281 = vld [vmem:[%s250 + $0x78] sm:$0xff]
        %v282 = vmul.f32 %v266, %v266
        %v283 = vmul.f32 %v267, %v267
        %v284 = vmul.f32 %v268, %v268
        %v285 = vmul.f32 %v269, %v269
        %v286 = vmul.f32 %v270, %v270
        %v287 = vmul.f32 %v271, %v271
        %v288 = vmul.f32 %v272, %v272
        %v289 = vmul.f32 %v273, %v273
        %v290 = vmul.f32 %v274, %v274
        %v291 = vmul.f32 %v275, %v275
        %v292 = vmul.f32 %v276, %v276
        %v293 = vmul.f32 %v277, %v277
        %v294 = vmul.f32 %v278, %v278
        %v295 = vmul.f32 %v279, %v279
        %v296 = vmul.f32 %v280, %v280
        %v297 = vmul.f32 %v281, %v281
        %vm298 = vcmask 523264
        %v299 = vsel %vm298, %v282, 0.0
        %300 = vadd.xlane.f32.xlu0 %v299
        %v301 = vpop.xlane.xlu0 %300
        %v302 = vsel %vm298, %v283, 0.0
        %303 = vadd.xlane.f32.xlu0 %v302
        %v304 = vpop.xlane.xlu0 %303
        %v305 = vsel %vm298, %v284, 0.0
        %306 = vadd.xlane.f32.xlu0 %v305
        %v307 = vpop.xlane.xlu0 %306
        %v308 = vsel %vm298, %v285, 0.0
        %309 = vadd.xlane.f32.xlu0 %v308
        %v310 = vpop.xlane.xlu0 %309
        %v311 = vsel %vm298, %v286, 0.0
        %312 = vadd.xlane.f32.xlu0 %v311
        %v313 = vpop.xlane.xlu0 %312
        %v314 = vsel %vm298, %v287, 0.0
        %315 = vadd.xlane.f32.xlu0 %v314
        %v316 = vpop.xlane.xlu0 %315
        %v317 = vsel %vm298, %v288, 0.0
        %318 = vadd.xlane.f32.xlu0 %v317
        %v319 = vpop.xlane.xlu0 %318
        %v320 = vsel %vm298, %v289, 0.0
        %321 = vadd.xlane.f32.xlu0 %v320
        %v322 = vpop.xlane.xlu0 %321
        %v323 = vsel %vm298, %v290, 0.0
        %324 = vadd.xlane.f32.xlu0 %v323
        %v325 = vpop.xlane.xlu0 %324
        %v326 = vsel %vm298, %v291, 0.0
        %327 = vadd.xlane.f32.xlu0 %v326
        %v328 = vpop.xlane.xlu0 %327
        %v329 = vsel %vm298, %v292, 0.0
        %330 = vadd.xlane.f32.xlu0 %v329
        %v331 = vpop.xlane.xlu0 %330
        %v332 = vsel %vm298, %v293, 0.0
        %333 = vadd.xlane.f32.xlu0 %v332
        %v334 = vpop.xlane.xlu0 %333
        %v335 = vsel %vm298, %v294, 0.0
        %336 = vadd.xlane.f32.xlu0 %v335
        %v337 = vpop.xlane.xlu0 %336
        %v338 = vsel %vm298, %v295, 0.0
        %339 = vadd.xlane.f32.xlu0 %v338
        %v340 = vpop.xlane.xlu0 %339
        %v341 = vsel %vm298, %v296, 0.0
        %342 = vadd.xlane.f32.xlu0 %v341
        %v343 = vpop.xlane.xlu0 %342
        %v344 = vsel %vm298, %v297, 0.0
        %345 = vadd.xlane.f32.xlu0 %v344
        %v346 = vpop.xlane.xlu0 %345
        %v347 = vmax.f32 %v301, 1e-24
        %v348 = vmax.f32 %v304, 1e-24
        %v349 = vmax.f32 %v307, 1e-24
        %v350 = vmax.f32 %v310, 1e-24
        %v351 = vmax.f32 %v313, 1e-24
        %v352 = vmax.f32 %v316, 1e-24
        %v353 = vmax.f32 %v319, 1e-24
        %v354 = vmax.f32 %v322, 1e-24
        %v355 = vmax.f32 %v325, 1e-24
        %v356 = vmax.f32 %v328, 1e-24
        %v357 = vmax.f32 %v331, 1e-24
        %v358 = vmax.f32 %v334, 1e-24
        %v359 = vmax.f32 %v337, 1e-24
        %v360 = vmax.f32 %v340, 1e-24
        %v361 = vmax.f32 %v343, 1e-24
        %v362 = vmax.f32 %v346, 1e-24
        %v363 = vrsqrt.pop %v347
        %v364 = vrsqrt.pop %v348
        %v365 = vrsqrt.pop %v349
        %v366 = vrsqrt.pop %v350
        %v367 = vrsqrt.pop %v351
        %v368 = vrsqrt.pop %v352
        %v369 = vrsqrt.pop %v353
        %v370 = vrsqrt.pop %v354
        %v371 = vrsqrt.pop %v355
        %v372 = vrsqrt.pop %v356
        %v373 = vrsqrt.pop %v357
        %v374 = vrsqrt.pop %v358
        %v375 = vrsqrt.pop %v359
        %v376 = vrsqrt.pop %v360
        %v377 = vrsqrt.pop %v361
        %v378 = vrsqrt.pop %v362
        %v379 = vmul.f32 %v266, %v363
        %v380 = vmul.f32 %v267, %v364
        %v381 = vmul.f32 %v268, %v365
        %v382 = vmul.f32 %v269, %v366
        %v383 = vmul.f32 %v270, %v367
        %v384 = vmul.f32 %v271, %v368
        %v385 = vmul.f32 %v272, %v369
        %v386 = vmul.f32 %v273, %v370
        %v387 = vmul.f32 %v274, %v371
        %v388 = vmul.f32 %v275, %v372
        %v389 = vmul.f32 %v276, %v373
        %v390 = vmul.f32 %v277, %v374
        %v391 = vmul.f32 %v278, %v375
        %v392 = vmul.f32 %v279, %v376
        %v393 = vmul.f32 %v280, %v377
        %v394 = vmul.f32 %v281, %v378
        %v395 = vpack.c.bf16 %v380, %v379
        %v396 = vpack.c.bf16 %v382, %v381
        %v397 = vpack.c.bf16 %v384, %v383
        %v398 = vpack.c.bf16 %v386, %v385
        %v399 = vpack.c.bf16 %v388, %v387
        %v400 = vpack.c.bf16 %v390, %v389
        %v401 = vpack.c.bf16 %v392, %v391
        %v402 = vpack.c.bf16 %v394, %v393
        %v403 = vld [vmem:[%s2] sm:$0xf]
        %v404 = vld [vmem:[%s2 + $0x4] sm:$0xf]
        %v405 = vld [vmem:[%s2 + $0x8] sm:$0xf]
        %v406 = vld [vmem:[%s2 + $0xc] sm:$0xf]
        %v407 = vld [vmem:[%s2 + $0x10] sm:$0xf]
        %v408 = vld [vmem:[%s2 + $0x14] sm:$0xf]
        %v409 = vld [vmem:[%s2 + $0x18] sm:$0xf]
        %v410 = vld [vmem:[%s2 + $0x1c] sm:$0xf]
        %v419 = vunpack.c.l.b16 %v403
        %v420 = vunpack.c.l.b16 %v404
        %v421 = vunpack.c.l.b16 %v405
        %v422 = vunpack.c.l.b16 %v406
        %v423 = vunpack.c.l.b16 %v407
        %v424 = vunpack.c.l.b16 %v408
        %v425 = vunpack.c.l.b16 %v409
        %v426 = vunpack.c.l.b16 %v410
        %v427 = vpack.c.b16 %v420, %v419
        %v428 = vpack.c.b16 %v422, %v421
        %v429 = vpack.c.b16 %v424, %v423
        %v430 = vpack.c.b16 %v426, %v425
        %v436 = vsel %vm298, %v395, 0
        %v439 = vsel %vm298, %v396, 0
        %v442 = vsel %vm298, %v397, 0
        %v445 = vsel %vm298, %v398, 0
        %v448 = vsel %vm298, %v399, 0
        %v451 = vsel %vm298, %v400, 0
        %v454 = vsel %vm298, %v401, 0
        %v457 = vsel %vm298, %v402, 0
        %459 = vmatprep.subr.bf16.mxu0 0
        %460 = vmatpush1.bf16.msra.mxu0 %v427
        %461 = vmatprep.subr.bf16.mxu0 0
        %462 = vmatpush1.bf16.msra.mxu0 %v428
        %463 = vmatprep.subr.bf16.mxu0 0
        %464 = vmatpush1.bf16.msra.mxu0 %v429
        %465 = vmatprep.subr.bf16.mxu0 0
        %466 = vmatpush1.bf16.msra.mxu0 %v430
        %467 = vmatprep.subr.bf16.mxu0 0
        %468 = vmatpush1.bf16.msra.mxu0 0
        %469 = vmatprep.subr.bf16.mxu0 0
        %470 = vmatpush1.bf16.msra.mxu0 0
        %471 = vmatprep.subr.bf16.mxu0 0
        %472 = vmatpush1.bf16.msra.mxu0 0
        %473 = vmatprep.subr.bf16.mxu0 0
        %474 = vmatpush1.bf16.msra.mxu0 0
        %475 = vmatprep.subr.bf16.mxu0 0
        %476 = vmatpush1.bf16.msra.mxu0 0
        %477 = vmatprep.subr.bf16.mxu0 0
        %478 = vmatpush1.bf16.msra.mxu0 0
        %479 = vmatprep.subr.bf16.mxu0 0
        %480 = vmatpush1.bf16.msra.mxu0 0
        %481 = vmatprep.subr.bf16.mxu0 0
        %482 = vmatpush1.bf16.msra.mxu0 0
        %483 = vmatprep.subr.bf16.mxu0 0
        %484 = vmatpush1.bf16.msra.mxu0 0
        %485 = vmatprep.subr.bf16.mxu0 0
        %486 = vmatpush1.bf16.msra.mxu0 0
        %487 = vmatprep.subr.bf16.mxu0 0
        %488 = vmatpush1.bf16.msra.mxu0 0
        %489 = vmatprep.subr.bf16.mxu0 0
        %490 = vmatpush1.bf16.msra.mxu0 0
        %491 = vmatprep.mubr.bf16.mxu0 0
        %492 = vmatmul.mubr.bf16.gmra.mrb[0].mxu0 %v436
        %v493 = vpop.f32.mrb[0].mxu0
        %v494 = vadd.f32 0.0, %v493
        %v495 = vpop.f32.mrb[0].mxu0
        %v496 = vpop.f32.mrb[0].mxu0
        %v497 = vadd.f32 0.0, %v496
        %v498 = vpop.f32.mrb[0].mxu0
        %499 = vmatprep.mubr.bf16.mxu0 0
        %500 = vmatmul.mubr.bf16.gmra.mrb[0].mxu0 %v439
        %v501 = vpop.f32.mrb[0].mxu0
        %v502 = vadd.f32 0.0, %v501
        %v503 = vpop.f32.mrb[0].mxu0
        %v504 = vpop.f32.mrb[0].mxu0
        %v505 = vadd.f32 0.0, %v504
        %v506 = vpop.f32.mrb[0].mxu0
        %507 = vmatprep.mubr.bf16.mxu0 0
        %508 = vmatmul.mubr.bf16.gmra.mrb[0].mxu0 %v442
        %v509 = vpop.f32.mrb[0].mxu0
        %v510 = vadd.f32 0.0, %v509
        %v511 = vpop.f32.mrb[0].mxu0
        %v512 = vpop.f32.mrb[0].mxu0
        %v513 = vadd.f32 0.0, %v512
        %v514 = vpop.f32.mrb[0].mxu0
        %515 = vmatprep.mubr.bf16.mxu0 0
        %516 = vmatmul.mubr.bf16.gmra.mrb[0].mxu0 %v445
        %v517 = vpop.f32.mrb[0].mxu0
        %v518 = vadd.f32 0.0, %v517
        %v519 = vpop.f32.mrb[0].mxu0
        %v520 = vpop.f32.mrb[0].mxu0
        %v521 = vadd.f32 0.0, %v520
        %v522 = vpop.f32.mrb[0].mxu0
        %523 = vmatprep.mubr.bf16.mxu0 0
        %524 = vmatmul.mubr.bf16.gmra.mrb[0].mxu0 %v448
        %v525 = vpop.f32.mrb[0].mxu0
        %v526 = vadd.f32 0.0, %v525
        %v527 = vpop.f32.mrb[0].mxu0
        %v528 = vpop.f32.mrb[0].mxu0
        %v529 = vadd.f32 0.0, %v528
        %v530 = vpop.f32.mrb[0].mxu0
        %531 = vmatprep.mubr.bf16.mxu0 0
        %532 = vmatmul.mubr.bf16.gmra.mrb[0].mxu0 %v451
        %v533 = vpop.f32.mrb[0].mxu0
        %v534 = vadd.f32 0.0, %v533
        %v535 = vpop.f32.mrb[0].mxu0
        %v536 = vpop.f32.mrb[0].mxu0
        %v537 = vadd.f32 0.0, %v536
        %v538 = vpop.f32.mrb[0].mxu0
        %539 = vmatprep.mubr.bf16.mxu0 0
        %540 = vmatmul.mubr.bf16.gmra.mrb[0].mxu0 %v454
        %v541 = vpop.f32.mrb[0].mxu0
        %v542 = vadd.f32 0.0, %v541
        %v543 = vpop.f32.mrb[0].mxu0
        %v544 = vpop.f32.mrb[0].mxu0
        %v545 = vadd.f32 0.0, %v544
        %v546 = vpop.f32.mrb[0].mxu0
        %547 = vmatprep.mubr.bf16.mxu0 0
        %548 = vmatmul.mubr.bf16.gmra.mrb[0].mxu0 %v457
        %v549 = vpop.f32.mrb[0].mxu0
        %v550 = vadd.f32 0.0, %v549
        %v551 = vpop.f32.mrb[0].mxu0
        %v552 = vpop.f32.mrb[0].mxu0
        %v553 = vadd.f32 0.0, %v552
        %v554 = vpop.f32.mrb[0].mxu0
        %555 = vdwg.mxu0
        %v556 = vld [vmem:[%s244] sm:$0xff]
        %v557 = vld [vmem:[%s244 + $0x8] sm:$0xff]
        %v558 = vld [vmem:[%s244 + $0x10] sm:$0xff]
        %v559 = vld [vmem:[%s244 + $0x18] sm:$0xff]
        %v560 = vld [vmem:[%s244 + $0x20] sm:$0xff]
        %v561 = vld [vmem:[%s244 + $0x28] sm:$0xff]
        %v562 = vld [vmem:[%s244 + $0x30] sm:$0xff]
        %v563 = vld [vmem:[%s244 + $0x38] sm:$0xff]
        %v564 = vld [vmem:[%s244 + $0x40] sm:$0xff]
        %v565 = vld [vmem:[%s244 + $0x48] sm:$0xff]
        %v566 = vld [vmem:[%s244 + $0x50] sm:$0xff]
        %v567 = vld [vmem:[%s244 + $0x58] sm:$0xff]
        %v568 = vld [vmem:[%s244 + $0x60] sm:$0xff]
        %v569 = vld [vmem:[%s244 + $0x68] sm:$0xff]
        %v570 = vld [vmem:[%s244 + $0x70] sm:$0xff]
        %v571 = vld [vmem:[%s244 + $0x78] sm:$0xff]
        %v572 = vlaneseq
        %v573 = vand.u32 %v572, 127
        %574 = vset.pattern.permute.xlu0 0
        %575 = vperm.xlu0 %574, %v556
        %v576 = vpop.permute.xlu0 %575
        %577 = vset.pattern.permute.xlu0 0
        %578 = vperm.xlu0 %577, %v557
        %v579 = vpop.permute.xlu0 %578
        %580 = vset.pattern.permute.xlu0 0
        %581 = vperm.xlu0 %580, %v558
        %v582 = vpop.permute.xlu0 %581
        %583 = vset.pattern.permute.xlu0 0
        %584 = vperm.xlu0 %583, %v559
        %v585 = vpop.permute.xlu0 %584
        %586 = vset.pattern.permute.xlu0 0
        %587 = vperm.xlu0 %586, %v560
        %v588 = vpop.permute.xlu0 %587
        %589 = vset.pattern.permute.xlu0 0
        %590 = vperm.xlu0 %589, %v561
        %v591 = vpop.permute.xlu0 %590
        %592 = vset.pattern.permute.xlu0 0
        %593 = vperm.xlu0 %592, %v562
        %v594 = vpop.permute.xlu0 %593
        %595 = vset.pattern.permute.xlu0 0
        %596 = vperm.xlu0 %595, %v563
        %v597 = vpop.permute.xlu0 %596
        %598 = vset.pattern.permute.xlu0 0
        %599 = vperm.xlu0 %598, %v564
        %v600 = vpop.permute.xlu0 %599
        %601 = vset.pattern.permute.xlu0 0
        %602 = vperm.xlu0 %601, %v565
        %v603 = vpop.permute.xlu0 %602
        %604 = vset.pattern.permute.xlu0 0
        %605 = vperm.xlu0 %604, %v566
        %v606 = vpop.permute.xlu0 %605
        %607 = vset.pattern.permute.xlu0 0
        %608 = vperm.xlu0 %607, %v567
        %v609 = vpop.permute.xlu0 %608
        %610 = vset.pattern.permute.xlu0 0
        %611 = vperm.xlu0 %610, %v568
        %v612 = vpop.permute.xlu0 %611
        %613 = vset.pattern.permute.xlu0 0
        %614 = vperm.xlu0 %613, %v569
        %v615 = vpop.permute.xlu0 %614
        %616 = vset.pattern.permute.xlu0 0
        %617 = vperm.xlu0 %616, %v570
        %v618 = vpop.permute.xlu0 %617
        %619 = vset.pattern.permute.xlu0 0
        %620 = vperm.xlu0 %619, %v571
        %v621 = vpop.permute.xlu0 %620
        %vm622 = vcmp.eq.s32.totalorder %v573, %v576
        %vm623 = vcmp.eq.s32.totalorder %v573, %v579
        %vm624 = vcmp.eq.s32.totalorder %v573, %v582
        %vm625 = vcmp.eq.s32.totalorder %v573, %v585
        %vm626 = vcmp.eq.s32.totalorder %v573, %v588
        %vm627 = vcmp.eq.s32.totalorder %v573, %v591
        %vm628 = vcmp.eq.s32.totalorder %v573, %v594
        %vm629 = vcmp.eq.s32.totalorder %v573, %v597
        %vm630 = vcmp.eq.s32.totalorder %v573, %v600
        %vm631 = vcmp.eq.s32.totalorder %v573, %v603
        %vm632 = vcmp.eq.s32.totalorder %v573, %v606
        %vm633 = vcmp.eq.s32.totalorder %v573, %v609
        %vm634 = vcmp.eq.s32.totalorder %v573, %v612
        %vm635 = vcmp.eq.s32.totalorder %v573, %v615
        %vm636 = vcmp.eq.s32.totalorder %v573, %v618
        %vm637 = vcmp.eq.s32.totalorder %v573, %v621
        %v638 = vstv %s265
        %v639 = vmul.f32 %v638, %v494
        %v640 = vmul.f32 %v638, %v497
        %v641 = vmul.f32 %v638, %v502
        %v642 = vmul.f32 %v638, %v505
        %v643 = vmul.f32 %v638, %v510
        %v644 = vmul.f32 %v638, %v513
        %v645 = vmul.f32 %v638, %v518
        %v646 = vmul.f32 %v638, %v521
        %v647 = vmul.f32 %v638, %v526
        %v648 = vmul.f32 %v638, %v529
        %v649 = vmul.f32 %v638, %v534
        %v650 = vmul.f32 %v638, %v537
        %v651 = vmul.f32 %v638, %v542
        %v652 = vmul.f32 %v638, %v545
        %v653 = vmul.f32 %v638, %v550
        %v654 = vmul.f32 %v638, %v553
        %v655 = vsel %vm622, %v639, 0.0
        %v656 = vsel %vm623, %v640, 0.0
        %v657 = vsel %vm624, %v641, 0.0
        %v658 = vsel %vm625, %v642, 0.0
        %v659 = vsel %vm626, %v643, 0.0
        %v660 = vsel %vm627, %v644, 0.0
        %v661 = vsel %vm628, %v645, 0.0
        %v662 = vsel %vm629, %v646, 0.0
        %v663 = vsel %vm630, %v647, 0.0
        %v664 = vsel %vm631, %v648, 0.0
        %v665 = vsel %vm632, %v649, 0.0
        %v666 = vsel %vm633, %v650, 0.0
        %v667 = vsel %vm634, %v651, 0.0
        %v668 = vsel %vm635, %v652, 0.0
        %v669 = vsel %vm636, %v653, 0.0
        %v670 = vsel %vm637, %v654, 0.0
        %671 = vadd.xlane.f32.xlu0 %v655
        %v672 = vpop.xlane.xlu0 %671
        %673 = vadd.xlane.f32.xlu0 %v656
        %v674 = vpop.xlane.xlu0 %673
        %675 = vadd.xlane.f32.xlu0 %v657
        %v676 = vpop.xlane.xlu0 %675
        %677 = vadd.xlane.f32.xlu0 %v658
        %v678 = vpop.xlane.xlu0 %677
        %679 = vadd.xlane.f32.xlu0 %v659
        %v680 = vpop.xlane.xlu0 %679
        %681 = vadd.xlane.f32.xlu0 %v660
        %v682 = vpop.xlane.xlu0 %681
        %683 = vadd.xlane.f32.xlu0 %v661
        %v684 = vpop.xlane.xlu0 %683
        %685 = vadd.xlane.f32.xlu0 %v662
        %v686 = vpop.xlane.xlu0 %685
        %687 = vadd.xlane.f32.xlu0 %v663
        %v688 = vpop.xlane.xlu0 %687
        %689 = vadd.xlane.f32.xlu0 %v664
        %v690 = vpop.xlane.xlu0 %689
        %691 = vadd.xlane.f32.xlu0 %v665
        %v692 = vpop.xlane.xlu0 %691
        %693 = vadd.xlane.f32.xlu0 %v666
        %v694 = vpop.xlane.xlu0 %693
        %695 = vadd.xlane.f32.xlu0 %v667
        %v696 = vpop.xlane.xlu0 %695
        %697 = vadd.xlane.f32.xlu0 %v668
        %v698 = vpop.xlane.xlu0 %697
        %699 = vadd.xlane.f32.xlu0 %v669
        %v700 = vpop.xlane.xlu0 %699
        %701 = vadd.xlane.f32.xlu0 %v670
        %v702 = vpop.xlane.xlu0 %701
        %s703 = smul.f32 %s265, 0.2
        %v704 = vstv %s703
        %v705 = vsub.f32 %v672, %v704
        %v706 = vsub.f32 %v674, %v704
        %v707 = vsub.f32 %v676, %v704
        %v708 = vsub.f32 %v678, %v704
        %v709 = vsub.f32 %v680, %v704
        %v710 = vsub.f32 %v682, %v704
        %v711 = vsub.f32 %v684, %v704
        %v712 = vsub.f32 %v686, %v704
        %v713 = vsub.f32 %v688, %v704
        %v714 = vsub.f32 %v690, %v704
        %v715 = vsub.f32 %v692, %v704
        %v716 = vsub.f32 %v694, %v704
        %v717 = vsub.f32 %v696, %v704
        %v718 = vsub.f32 %v698, %v704
        %v719 = vsub.f32 %v700, %v704
        %v720 = vsub.f32 %v702, %v704
        %721 = vmax.xlane.f32.xlu0 %v639
        %v722 = vpop.xlane.xlu0 %721
        %723 = vmax.xlane.f32.xlu0 %v640
        %v724 = vpop.xlane.xlu0 %723
        %725 = vmax.xlane.f32.xlu0 %v641
        %v726 = vpop.xlane.xlu0 %725
        %727 = vmax.xlane.f32.xlu0 %v642
        %v728 = vpop.xlane.xlu0 %727
        %729 = vmax.xlane.f32.xlu0 %v643
        %v730 = vpop.xlane.xlu0 %729
        %731 = vmax.xlane.f32.xlu0 %v644
        %v732 = vpop.xlane.xlu0 %731
        %733 = vmax.xlane.f32.xlu0 %v645
        %v734 = vpop.xlane.xlu0 %733
        %735 = vmax.xlane.f32.xlu0 %v646
        %v736 = vpop.xlane.xlu0 %735
        %737 = vmax.xlane.f32.xlu0 %v647
        %v738 = vpop.xlane.xlu0 %737
        %739 = vmax.xlane.f32.xlu0 %v648
        %v740 = vpop.xlane.xlu0 %739
        %741 = vmax.xlane.f32.xlu0 %v649
        %v742 = vpop.xlane.xlu0 %741
        %743 = vmax.xlane.f32.xlu0 %v650
        %v744 = vpop.xlane.xlu0 %743
        %745 = vmax.xlane.f32.xlu0 %v651
        %v746 = vpop.xlane.xlu0 %745
        %747 = vmax.xlane.f32.xlu0 %v652
        %v748 = vpop.xlane.xlu0 %747
        %749 = vmax.xlane.f32.xlu0 %v653
        %v750 = vpop.xlane.xlu0 %749
        %751 = vmax.xlane.f32.xlu0 %v654
        %v752 = vpop.xlane.xlu0 %751
        %v753 = vmax.f32 %v722, %v705
        %v754 = vmax.f32 %v724, %v706
        %v755 = vmax.f32 %v726, %v707
        %v756 = vmax.f32 %v728, %v708
        %v757 = vmax.f32 %v730, %v709
        %v758 = vmax.f32 %v732, %v710
        %v759 = vmax.f32 %v734, %v711
        %v760 = vmax.f32 %v736, %v712
        %v761 = vmax.f32 %v738, %v713
        %v762 = vmax.f32 %v740, %v714
        %v763 = vmax.f32 %v742, %v715
        %v764 = vmax.f32 %v744, %v716
        %v765 = vmax.f32 %v746, %v717
        %v766 = vmax.f32 %v748, %v718
        %v767 = vmax.f32 %v750, %v719
        %v768 = vmax.f32 %v752, %v720
        %v769 = vsub.f32 %v639, %v753
        %v770 = vsub.f32 %v640, %v754
        %v771 = vsub.f32 %v641, %v755
        %v772 = vsub.f32 %v642, %v756
        %v773 = vsub.f32 %v643, %v757
        %v774 = vsub.f32 %v644, %v758
        %v775 = vsub.f32 %v645, %v759
        %v776 = vsub.f32 %v646, %v760
        %v777 = vsub.f32 %v647, %v761
        %v778 = vsub.f32 %v648, %v762
        %v779 = vsub.f32 %v649, %v763
        %v780 = vsub.f32 %v650, %v764
        %v781 = vsub.f32 %v651, %v765
        %v782 = vsub.f32 %v652, %v766
        %v783 = vsub.f32 %v653, %v767
        %v784 = vsub.f32 %v654, %v768
        %v785 = vmul.f32 %v769, 1.442695
        %v786 = vpow.pop %v785
        %v787 = vmul.f32 %v770, 1.442695
        %v788 = vpow.pop %v787
        %v789 = vmul.f32 %v771, 1.442695
        %v790 = vpow.pop %v789
        %v791 = vmul.f32 %v772, 1.442695
        %v792 = vpow.pop %v791
        %v793 = vmul.f32 %v773, 1.442695
        %v794 = vpow.pop %v793
        %v795 = vmul.f32 %v774, 1.442695
        %v796 = vpow.pop %v795
        %v797 = vmul.f32 %v775, 1.442695
        %v798 = vpow.pop %v797
        %v799 = vmul.f32 %v776, 1.442695
        %v800 = vpow.pop %v799
        %v801 = vmul.f32 %v777, 1.442695
        %v802 = vpow.pop %v801
        %v803 = vmul.f32 %v778, 1.442695
        %v804 = vpow.pop %v803
        %v805 = vmul.f32 %v779, 1.442695
        %v806 = vpow.pop %v805
        %v807 = vmul.f32 %v780, 1.442695
        %v808 = vpow.pop %v807
        %v809 = vmul.f32 %v781, 1.442695
        %v810 = vpow.pop %v809
        %v811 = vmul.f32 %v782, 1.442695
        %v812 = vpow.pop %v811
        %v813 = vmul.f32 %v783, 1.442695
        %v814 = vpow.pop %v813
        %v815 = vmul.f32 %v784, 1.442695
        %v816 = vpow.pop %v815
        %817 = vadd.xlane.f32.xlu0 %v786
        %v818 = vpop.xlane.xlu0 %817
        %819 = vadd.xlane.f32.xlu0 %v788
        %v820 = vpop.xlane.xlu0 %819
        %821 = vadd.xlane.f32.xlu0 %v790
        %v822 = vpop.xlane.xlu0 %821
        %823 = vadd.xlane.f32.xlu0 %v792
        %v824 = vpop.xlane.xlu0 %823
        %825 = vadd.xlane.f32.xlu0 %v794
        %v826 = vpop.xlane.xlu0 %825
        %827 = vadd.xlane.f32.xlu0 %v796
        %v828 = vpop.xlane.xlu0 %827
        %829 = vadd.xlane.f32.xlu0 %v798
        %v830 = vpop.xlane.xlu0 %829
        %831 = vadd.xlane.f32.xlu0 %v800
        %v832 = vpop.xlane.xlu0 %831
        %833 = vadd.xlane.f32.xlu0 %v802
        %v834 = vpop.xlane.xlu0 %833
        %835 = vadd.xlane.f32.xlu0 %v804
        %v836 = vpop.xlane.xlu0 %835
        %837 = vadd.xlane.f32.xlu0 %v806
        %v838 = vpop.xlane.xlu0 %837
        %839 = vadd.xlane.f32.xlu0 %v808
        %v840 = vpop.xlane.xlu0 %839
        %841 = vadd.xlane.f32.xlu0 %v810
        %v842 = vpop.xlane.xlu0 %841
        %843 = vadd.xlane.f32.xlu0 %v812
        %v844 = vpop.xlane.xlu0 %843
        %845 = vadd.xlane.f32.xlu0 %v814
        %v846 = vpop.xlane.xlu0 %845
        %847 = vadd.xlane.f32.xlu0 %v816
        %v848 = vpop.xlane.xlu0 %847
        %v849 = vsub.f32 %v705, %v753
        %v850 = vsub.f32 %v706, %v754
        %v851 = vsub.f32 %v707, %v755
        %v852 = vsub.f32 %v708, %v756
        %v853 = vsub.f32 %v709, %v757
        %v854 = vsub.f32 %v710, %v758
        %v855 = vsub.f32 %v711, %v759
        %v856 = vsub.f32 %v712, %v760
        %v857 = vsub.f32 %v713, %v761
        %v858 = vsub.f32 %v714, %v762
        %v859 = vsub.f32 %v715, %v763
        %v860 = vsub.f32 %v716, %v764
        %v861 = vsub.f32 %v717, %v765
        %v862 = vsub.f32 %v718, %v766
        %v863 = vsub.f32 %v719, %v767
        %v864 = vsub.f32 %v720, %v768
        %v865 = vmul.f32 %v849, 1.442695
        %v866 = vpow.pop %v865
        %v867 = vmul.f32 %v850, 1.442695
        %v868 = vpow.pop %v867
        %v869 = vmul.f32 %v851, 1.442695
        %v870 = vpow.pop %v869
        %v871 = vmul.f32 %v852, 1.442695
        %v872 = vpow.pop %v871
        %v873 = vmul.f32 %v853, 1.442695
        %v874 = vpow.pop %v873
        %v875 = vmul.f32 %v854, 1.442695
        %v876 = vpow.pop %v875
        %v877 = vmul.f32 %v855, 1.442695
        %v878 = vpow.pop %v877
        %v879 = vmul.f32 %v856, 1.442695
        %v880 = vpow.pop %v879
        %v881 = vmul.f32 %v857, 1.442695
        %v882 = vpow.pop %v881
        %v883 = vmul.f32 %v858, 1.442695
        %v884 = vpow.pop %v883
        %v885 = vmul.f32 %v859, 1.442695
        %v886 = vpow.pop %v885
        %v887 = vmul.f32 %v860, 1.442695
        %v888 = vpow.pop %v887
        %v889 = vmul.f32 %v861, 1.442695
        %v890 = vpow.pop %v889
        %v891 = vmul.f32 %v862, 1.442695
        %v892 = vpow.pop %v891
        %v893 = vmul.f32 %v863, 1.442695
        %v894 = vpow.pop %v893
        %v895 = vmul.f32 %v864, 1.442695
        %v896 = vpow.pop %v895
        %v897 = vsub.f32 %v672, %v753
        %v898 = vsub.f32 %v674, %v754
        %v899 = vsub.f32 %v676, %v755
        %v900 = vsub.f32 %v678, %v756
        %v901 = vsub.f32 %v680, %v757
        %v902 = vsub.f32 %v682, %v758
        %v903 = vsub.f32 %v684, %v759
        %v904 = vsub.f32 %v686, %v760
        %v905 = vsub.f32 %v688, %v761
        %v906 = vsub.f32 %v690, %v762
        %v907 = vsub.f32 %v692, %v763
        %v908 = vsub.f32 %v694, %v764
        %v909 = vsub.f32 %v696, %v765
        %v910 = vsub.f32 %v698, %v766
        %v911 = vsub.f32 %v700, %v767
        %v912 = vsub.f32 %v702, %v768
        %v913 = vmul.f32 %v897, 1.442695
        %v914 = vpow.pop %v913
        %v915 = vmul.f32 %v898, 1.442695
        %v916 = vpow.pop %v915
        %v917 = vmul.f32 %v899, 1.442695
        %v918 = vpow.pop %v917
        %v919 = vmul.f32 %v900, 1.442695
        %v920 = vpow.pop %v919
        %v921 = vmul.f32 %v901, 1.442695
        %v922 = vpow.pop %v921
        %v923 = vmul.f32 %v902, 1.442695
        %v924 = vpow.pop %v923
        %v925 = vmul.f32 %v903, 1.442695
        %v926 = vpow.pop %v925
        %v927 = vmul.f32 %v904, 1.442695
        %v928 = vpow.pop %v927
        %v929 = vmul.f32 %v905, 1.442695
        %v930 = vpow.pop %v929
        %v931 = vmul.f32 %v906, 1.442695
        %v932 = vpow.pop %v931
        %v933 = vmul.f32 %v907, 1.442695
        %v934 = vpow.pop %v933
        %v935 = vmul.f32 %v908, 1.442695
        %v936 = vpow.pop %v935
        %v937 = vmul.f32 %v909, 1.442695
        %v938 = vpow.pop %v937
        %v939 = vmul.f32 %v910, 1.442695
        %v940 = vpow.pop %v939
        %v941 = vmul.f32 %v911, 1.442695
        %v942 = vpow.pop %v941
        %v943 = vmul.f32 %v912, 1.442695
        %v944 = vpow.pop %v943
        %v945 = vsub.f32 %v818, %v914
        %v946 = vsub.f32 %v820, %v916
        %v947 = vsub.f32 %v822, %v918
        %v948 = vsub.f32 %v824, %v920
        %v949 = vsub.f32 %v826, %v922
        %v950 = vsub.f32 %v828, %v924
        %v951 = vsub.f32 %v830, %v926
        %v952 = vsub.f32 %v832, %v928
        %v953 = vsub.f32 %v834, %v930
        %v954 = vsub.f32 %v836, %v932
        %v955 = vsub.f32 %v838, %v934
        %v956 = vsub.f32 %v840, %v936
        %v957 = vsub.f32 %v842, %v938
        %v958 = vsub.f32 %v844, %v940
        %v959 = vsub.f32 %v846, %v942
        %v960 = vsub.f32 %v848, %v944
        %v961 = vadd.f32 %v866, %v945
        %v962 = vadd.f32 %v868, %v946
        %v963 = vadd.f32 %v870, %v947
        %v964 = vadd.f32 %v872, %v948
        %v965 = vadd.f32 %v874, %v949
        %v966 = vadd.f32 %v876, %v950
        %v967 = vadd.f32 %v878, %v951
        %v968 = vadd.f32 %v880, %v952
        %v969 = vadd.f32 %v882, %v953
        %v970 = vadd.f32 %v884, %v954
        %v971 = vadd.f32 %v886, %v955
        %v972 = vadd.f32 %v888, %v956
        %v973 = vadd.f32 %v890, %v957
        %v974 = vadd.f32 %v892, %v958
        %v975 = vadd.f32 %v894, %v959
        %v976 = vadd.f32 %v896, %v960
        %v977 = vlog2.pop %v961
        %v978 = vmul.f32 %v977, 0.6931472
        %v979 = vlog2.pop %v962
        %v980 = vmul.f32 %v979, 0.6931472
        %v981 = vlog2.pop %v963
        %v982 = vmul.f32 %v981, 0.6931472
        %v983 = vlog2.pop %v964
        %v984 = vmul.f32 %v983, 0.6931472
        %v985 = vlog2.pop %v965
        %v986 = vmul.f32 %v985, 0.6931472
        %v987 = vlog2.pop %v966
        %v988 = vmul.f32 %v987, 0.6931472
        %v989 = vlog2.pop %v967
        %v990 = vmul.f32 %v989, 0.6931472
        %v991 = vlog2.pop %v968
        %v992 = vmul.f32 %v991, 0.6931472
        %v993 = vlog2.pop %v969
        %v994 = vmul.f32 %v993, 0.6931472
        %v995 = vlog2.pop %v970
        %v996 = vmul.f32 %v995, 0.6931472
        %v997 = vlog2.pop %v971
        %v998 = vmul.f32 %v997, 0.6931472
        %v999 = vlog2.pop %v972
        %v1000 = vmul.f32 %v999, 0.6931472
        %v1001 = vlog2.pop %v973
        %v1002 = vmul.f32 %v1001, 0.6931472
        %v1003 = vlog2.pop %v974
        %v1004 = vmul.f32 %v1003, 0.6931472
        %v1005 = vlog2.pop %v975
        %v1006 = vmul.f32 %v1005, 0.6931472
        %v1007 = vlog2.pop %v976
        %v1008 = vmul.f32 %v1007, 0.6931472
        %v1009 = vadd.f32 %v753, %v978
        %v1010 = vadd.f32 %v754, %v980
        %v1011 = vadd.f32 %v755, %v982
        %v1012 = vadd.f32 %v756, %v984
        %v1013 = vadd.f32 %v757, %v986
        %v1014 = vadd.f32 %v758, %v988
        %v1015 = vadd.f32 %v759, %v990
        %v1016 = vadd.f32 %v760, %v992
        %v1017 = vadd.f32 %v761, %v994
        %v1018 = vadd.f32 %v762, %v996
        %v1019 = vadd.f32 %v763, %v998
        %v1020 = vadd.f32 %v764, %v1000
        %v1021 = vadd.f32 %v765, %v1002
        %v1022 = vadd.f32 %v766, %v1004
        %v1023 = vadd.f32 %v767, %v1006
        %v1024 = vadd.f32 %v768, %v1008
        %v1025 = vsub.f32 %v705, %v1009
        %v1026 = vsub.f32 %v706, %v1010
        %v1027 = vsub.f32 %v707, %v1011
        %v1028 = vsub.f32 %v708, %v1012
        %v1029 = vsub.f32 %v709, %v1013
        %v1030 = vsub.f32 %v710, %v1014
        %v1031 = vsub.f32 %v711, %v1015
        %v1032 = vsub.f32 %v712, %v1016
        %v1033 = vsub.f32 %v713, %v1017
        %v1034 = vsub.f32 %v714, %v1018
        %v1035 = vsub.f32 %v715, %v1019
        %v1036 = vsub.f32 %v716, %v1020
        %v1037 = vsub.f32 %v717, %v1021
        %v1038 = vsub.f32 %v718, %v1022
        %v1039 = vsub.f32 %v719, %v1023
        %v1040 = vsub.f32 %v720, %v1024
        %v1041 = vld [vmem:[#allocation3] sm:$0x1]
        %v1042 = vld [vmem:[%s256] sm:$0xff]
        %v1043 = vld [vmem:[%s256 + $0x8] sm:$0xff]
        %v1044 = vld [vmem:[%s256 + $0x10] sm:$0xff]
        %v1045 = vld [vmem:[%s256 + $0x18] sm:$0xff]
        %v1046 = vld [vmem:[%s256 + $0x20] sm:$0xff]
        %v1047 = vld [vmem:[%s256 + $0x28] sm:$0xff]
        %v1048 = vld [vmem:[%s256 + $0x30] sm:$0xff]
        %v1049 = vld [vmem:[%s256 + $0x38] sm:$0xff]
        %v1050 = vld [vmem:[%s256 + $0x40] sm:$0xff]
        %v1051 = vld [vmem:[%s256 + $0x48] sm:$0xff]
        %v1052 = vld [vmem:[%s256 + $0x50] sm:$0xff]
        %v1053 = vld [vmem:[%s256 + $0x58] sm:$0xff]
        %v1054 = vld [vmem:[%s256 + $0x60] sm:$0xff]
        %v1055 = vld [vmem:[%s256 + $0x68] sm:$0xff]
        %v1056 = vld [vmem:[%s256 + $0x70] sm:$0xff]
        %v1057 = vld [vmem:[%s256 + $0x78] sm:$0xff]
        %v1058 = vmul.f32 %v1025, %v1042
        %v1059 = vmul.f32 %v1026, %v1043
        %v1060 = vmul.f32 %v1027, %v1044
        %v1061 = vmul.f32 %v1028, %v1045
        %v1062 = vmul.f32 %v1029, %v1046
        %v1063 = vmul.f32 %v1030, %v1047
        %v1064 = vmul.f32 %v1031, %v1048
        %v1065 = vmul.f32 %v1032, %v1049
        %v1066 = vmul.f32 %v1033, %v1050
        %v1067 = vmul.f32 %v1034, %v1051
        %v1068 = vmul.f32 %v1035, %v1052
        %v1069 = vmul.f32 %v1036, %v1053
        %v1070 = vmul.f32 %v1037, %v1054
        %v1071 = vmul.f32 %v1038, %v1055
        %v1072 = vmul.f32 %v1039, %v1056
        %v1073 = vmul.f32 %v1040, %v1057
        %vm1074 = vcmask 7168
        %v1075 = vsel %vm1074, %v1058, 0.0
        %v1076 = vsel %vm1074, %v1059, 0.0
        %v1077 = vadd.f32 %v1075, %v1076
        %v1078 = vsel %vm1074, %v1060, 0.0
        %v1079 = vadd.f32 %v1077, %v1078
        %v1080 = vsel %vm1074, %v1061, 0.0
        %v1081 = vadd.f32 %v1079, %v1080
        %v1082 = vsel %vm1074, %v1062, 0.0
        %v1083 = vadd.f32 %v1081, %v1082
        %v1084 = vsel %vm1074, %v1063, 0.0
        %v1085 = vadd.f32 %v1083, %v1084
        %v1086 = vsel %vm1074, %v1064, 0.0
        %v1087 = vadd.f32 %v1085, %v1086
        %v1088 = vsel %vm1074, %v1065, 0.0
        %v1089 = vadd.f32 %v1087, %v1088
        %v1090 = vsel %vm1074, %v1066, 0.0
        %v1091 = vadd.f32 %v1089, %v1090
        %v1092 = vsel %vm1074, %v1067, 0.0
        %v1093 = vadd.f32 %v1091, %v1092
        %v1094 = vsel %vm1074, %v1068, 0.0
        %v1095 = vadd.f32 %v1093, %v1094
        %v1096 = vsel %vm1074, %v1069, 0.0
        %v1097 = vadd.f32 %v1095, %v1096
        %v1098 = vsel %vm1074, %v1070, 0.0
        %v1099 = vadd.f32 %v1097, %v1098
        %v1100 = vsel %vm1074, %v1071, 0.0
        %v1101 = vadd.f32 %v1099, %v1100
        %v1102 = vsel %vm1074, %v1072, 0.0
        %v1103 = vadd.f32 %v1101, %v1102
        %v1104 = vsel %vm1074, %v1073, 0.0
        %v1105 = vadd.f32 %v1103, %v1104
        %1106 = vadd.xlane.f32.xlu0 %v1105
        %v1107 = vpop.xlane.xlu0 %1106
        %v1108 = vrot.slane %v1107, 4
        %v1109 = vadd.f32 %v1107, %v1108
        %v1110 = vrot.slane %v1109, 2
        %v1111 = vadd.f32 %v1109, %v1110
        %v1112 = vrot.slane %v1111, 1
        %v1113 = vadd.f32 %v1111, %v1112
        %s1114 = vtos %v1113
        %v1115 = vstv %s1114
        %v1116 = vadd.f32 %v1041, %v1115
        %vm1117 = vcmask 0
        %1118 = vst.msk [vmem:[#allocation3] sm:$0x1] %vm1117, %v1116
        %p1119 = scmp.eq.s32.totalorder %s18, 2
        // Predicated region
        $region45: #{tpu_custom_call.1} parent=39 // pred_check
          %p1120 = pneg %p1119
        $region46: #{tpu_custom_call.1} parent=39 // pred_check_branch
          %1122 = sbr.rel (%p1120) target = $region48
        $region47: #{tpu_custom_call.1} parent=39 // pred_region
          %v1123 = vld [vmem:[#allocation3] sm:$0x1]
          %v1124 = vmul.f32 %v1123, 0.0033333334
          %v1125 = vsub.f32 0.0, %v1124
          %1126 = vst.msk [vmem:[#allocation3] sm:$0x1] %vm1117, %v1125
        $region48: #{tpu_custom_call.1} parent=39 // pred_fallthru
          _
        // Predicated region
        $region49: #{tpu_custom_call.1} parent=39 // pred_check
          %p1127 = pneg %p151
        $region50: #{tpu_custom_call.1} parent=39 // pred_check_branch
          %1129 = sbr.rel (%p1127) target = $region52
        $region51: #{tpu_custom_call.1} parent=39 // pred_region
          %s1131 = ssub.s32 16, 16
          %1132 = vsyncadd [#allocation4], %s1131
          %s1134 = sshll.u32 [#allocation3], 4
          %s1135 = int_to_ptr.vmem [resolvable:$true] %s1134
          %1137 = dma.vmem_to_hbm [thread:$0]  %s1135, 16, %s5, [#allocation4]
        $region52: #{tpu_custom_call.1} parent=39 // pred_fallthru
          _
        // Predicated region
        $region53: #{tpu_custom_call.1} parent=39 // pred_check
          %p1138 = pneg %p151
        $region54: #{tpu_custom_call.1} parent=39 // pred_check_branch
          %1140 = sbr.rel (%p1138) target = $region56
        $region55: #{tpu_custom_call.1} parent=39 // pred_region
          %1141 = dma.done [#allocation4], 16
        $region56: #{tpu_custom_call.1} parent=39 // pred_fallthru
          _
      $region40: #{tpu_custom_call.1} parent=5 // pred_fallthru
        _
      %p1142 = scmp.le.s32.totalorder 2, %s13
      // Predicated region
      $region57: #{tpu_custom_call.1} parent=5 // pred_check
        %p1143 = pneg %p1142
      $region58: #{tpu_custom_call.1} parent=5 // pred_check_branch
        %1145 = sbr.rel (%p1143) target = $region60
      $region59: #{tpu_custom_call.1} parent=5 // pred_region
        %s1146 = ssub.s32 %s13, 2
      $region60: #{tpu_custom_call.1} parent=5 // pred_fallthru
        _
    $region6: #{tpu_custom_call.1} parent=1 // loop_footer
      %s17 = sadd.s32 1, %s13
    $region7: #{tpu_custom_call.1} parent=1 // loop_footer_branch
      %12 = sbr.rel target = $region3
    $region8: #{tpu_custom_call.1} parent=1 // loop_exit
      _
    %1147 = vsyncpa [#allocation4], 1
    %s1148 = scalar_lea.sflag [#allocation4], 1
    %1149 = vsyncpa %s1148, 1

</llo_original>
